<compile_context>
chip_gen: v6e
topology: v6e:2x2x1
jax: 0.10.0
libtpu: 0.0.40
codegen_flags: <defaults>
</compile_context>

<pallas_src>
import jax
import jax.numpy as jnp
from jax.experimental import pallas as pl
from jax.experimental.pallas import tpu as pltpu


# ----------------------------------------------------------------------------
# helpers
# ----------------------------------------------------------------------------
def _pick_batch_tile(batch, emb_dim):
    """Balanced batch tile (multiple of 8), capped by a per-E working-set cap."""
    max_tile = 1024 if emb_dim <= 512 else 512
    n_tiles = pl.cdiv(batch, max_tile)
    tb = pl.cdiv(batch, n_tiles)          # balance tiles to minimize padding
    tb = ((tb + 7) // 8) * 8              # sublane multiple
    return max(8, min(tb, max_tile))


def _vmem_budget_bytes(tb, emb_dim, w_bytes):
    resident = w_bytes * emb_dim * 2 * emb_dim + 4 * 2 * emb_dim + 4 * 3 * emb_dim
    tiles = 2 * 2 * 4 * tb * emb_dim          # double-buffered input + output tile
    interm = 4 * tb * 2 * emb_dim             # [tb, 2E] fused activation
    budget = int(1.5 * (resident + tiles + interm)) + (4 << 20)
    # cap well below v7x's 64 MiB physical VMEM; harmless on v5e/v6e (128 MiB)
    return max(min(budget, 48 * 1024 * 1024), 16 * 1024 * 1024)


def _frfm_block(emb, w_cat, b_cat, emb_dim):
    """Fused FRFM: one [tb,E]@[E,2E] matmul, split -> (id, age, gender).

    emb stays f32 for the residual; only the dot operand is cast to the weight
    dtype (bf16 when use_bf16_matmul), accumulation in f32 on the MXU.
    """
    act = jnp.dot(emb.astype(w_cat.dtype), w_cat,
                  preferred_element_type=jnp.float32) + b_cat
    act = jnp.maximum(act, 0.0)                     # ReLU for both branches
    age = act[:, :emb_dim]                          # E multiple of 128 -> free view
    gen = act[:, emb_dim:]
    idf = emb - age - gen                           # residual identity feature
    return idf, age, gen


def _l2_normalize_rows(x):
    # F.normalize(p=2, dim=1, eps=1e-12): clamp squared norm at eps^2; rsqrt
    # goes to the otherwise-idle EUP slot instead of a full-width VPU divide.
    sq = jnp.sum(x * x, axis=1, keepdims=True)
    return x * jax.lax.rsqrt(jnp.maximum(sq, 1e-24))


def _pad_batch(x, padded_batch):
    batch = x.shape[0]
    if padded_batch == batch:
        return x
    return jnp.pad(x, ((0, padded_batch - batch), (0, 0)))


# ----------------------------------------------------------------------------
# Kernel 1: Multitask_DAL.forward(..., return_embeddings=True) hot path
# ----------------------------------------------------------------------------
def frfm_normalize_kernel(emb_ref, w_ref, b_ref, out_ref):
    emb_dim = emb_ref.shape[1]
    idf, _, _ = _frfm_block(emb_ref[...], w_ref[...], b_ref[...], emb_dim)
    out_ref[...] = _l2_normalize_rows(idf).astype(out_ref.dtype)


def multitask_dal_forward(embeddings, w_cat, b_cat, *,
                          use_bf16_matmul=True, out_dtype=jnp.float32):
    batch, emb_dim = embeddings.shape
    assert emb_dim % 128 == 0, "pad embedding_size to a multiple of 128"
    w_dtype = jnp.bfloat16 if use_bf16_matmul else jnp.float32
    w = w_cat.astype(w_dtype)
    b = b_cat.astype(jnp.float32)

    tb = _pick_batch_tile(batch, emb_dim)
    padded = pl.cdiv(batch, tb) * tb
    emb_p = _pad_batch(embeddings.astype(jnp.float32), padded)
    grid = (padded // tb,)
    w_bytes = jnp.dtype(w_dtype).itemsize

    cost = pl.CostEstimate(
        flops=2 * padded * emb_dim * 2 * emb_dim + 10 * padded * emb_dim,
        transcendentals=padded,
        bytes_accessed=(4 * 2 * padded * emb_dim
                        + w_bytes * 2 * emb_dim * emb_dim + 4 * 2 * emb_dim),
    )
    out = pl.pallas_call(
        frfm_normalize_kernel,
        out_shape=jax.ShapeDtypeStruct((padded, emb_dim), out_dtype),
        grid_spec=pltpu.PrefetchScalarGridSpec(
            num_scalar_prefetch=0,
            grid=grid,
            in_specs=[
                pl.BlockSpec((tb, emb_dim), lambda i: (i, 0)),
                pl.BlockSpec((emb_dim, 2 * emb_dim), lambda i: (0, 0)),   # resident
                pl.BlockSpec((1, 2 * emb_dim), lambda i: (0, 0)),         # resident
            ],
            out_specs=pl.BlockSpec((tb, emb_dim), lambda i: (i, 0)),
        ),
        compiler_params=pltpu.CompilerParams(
            dimension_semantics=("parallel",),
            vmem_limit_bytes=_vmem_budget_bytes(tb, emb_dim, w_bytes),
        ),
        cost_estimate=cost,
    )(emb_p, w, b)
    return out[:batch]


# ----------------------------------------------------------------------------
# Kernel 2: fused FRFM + normalize + BCCM projections (single launch)
# ----------------------------------------------------------------------------
def frfm_bccm_kernel(emb_ref, w_ref, b_ref, wb_ref, idn_ref, proj_ref):
    emb_dim = emb_ref.shape[1]
    idf, age, gen = _frfm_block(emb_ref[...], w_ref[...], b_ref[...], emb_dim)
    idn_ref[...] = _l2_normalize_rows(idf).astype(idn_ref.dtype)

    # BCCM Linear(E, 1, bias=False) as VPU lane reductions (an N=1 MXU matmul
    # would use 1/256 of the systolic array columns and pay push/pop latency).
    wb = wb_ref[...]                                               # [3, E] f32
    p_id = jnp.sum(idf * wb[0:1, :], axis=1, keepdims=True)        # [tb, 1]
    p_ag = jnp.sum(age * wb[1:2, :], axis=1, keepdims=True)
    p_gn = jnp.sum(gen * wb[2:3, :], axis=1, keepdims=True)
    proj_ref[...] = jnp.concatenate([p_id, p_ag, p_gn], axis=1)    # [tb, 3]


def _bccm_correlation(proj):
    """Exact torch BCCM semantics (centered stats, unbiased var) from [B,3]."""
    p_id, p_ag, p_gn = proj[:, 0], proj[:, 1], proj[:, 2]
    m_id, m_ag, m_gn = p_id.mean(), p_ag.mean(), p_gn.mean()
    v_id = p_id.var(ddof=1) + 1e-6
    v_ag = p_ag.var(ddof=1) + 1e-6
    v_gn = p_gn.var(ddof=1) + 1e-6
    ia = ((p_ag - m_ag) * (p_id - m_id)).mean() ** 2 / (v_ag * v_id)
    ig = ((p_gn - m_gn) * (p_id - m_id)).mean() ** 2 / (v_gn * v_id)
    ag = ((p_ag - m_ag) * (p_gn - m_gn)).mean() ** 2 / (v_ag * v_gn)
    return ((ia + ig + ag) / 3.0).reshape((1,))


def multitask_dal_frfm_bccm(embeddings, w_cat, b_cat, w_id, w_age, w_gen, *,
                            use_bf16_matmul=True, out_dtype=jnp.float32):
    batch, emb_dim = embeddings.shape
    assert emb_dim % 128 == 0, "pad embedding_size to a multiple of 128"
    w_dtype = jnp.bfloat16 if use_bf16_matmul else jnp.float32
    w = w_cat.astype(w_dtype)
    b = b_cat.astype(jnp.float32)
    w_bccm = jnp.concatenate([w_id, w_age, w_gen], axis=0).astype(jnp.float32)  # [3,E]

    tb = _pick_batch_tile(batch, emb_dim)
    padded = pl.cdiv(batch, tb) * tb
    emb_p = _pad_batch(embeddings.astype(jnp.float32), padded)
    grid = (padded // tb,)
    w_bytes = jnp.dtype(w_dtype).itemsize

    cost = pl.CostEstimate(
        flops=2 * padded * emb_dim * 2 * emb_dim + 18 * padded * emb_dim,
        transcendentals=padded,
        bytes_accessed=(4 * 2 * padded * emb_dim + 4 * 3 * padded
                        + w_bytes * 2 * emb_dim * emb_dim + 4 * 5 * emb_dim),
    )
    id_norm, proj = pl.pallas_call(
        frfm_bccm_kernel,
        out_shape=(
            jax.ShapeDtypeStruct((padded, emb_dim), out_dtype),
            jax.ShapeDtypeStruct((padded, 3), jnp.float32),
        ),
        grid_spec=pltpu.PrefetchScalarGridSpec(
            num_scalar_prefetch=0,
            grid=grid,
            in_specs=[
                pl.BlockSpec((tb, emb_dim), lambda i: (i, 0)),
                pl.BlockSpec((emb_dim, 2 * emb_dim), lambda i: (0, 0)),   # resident
                pl.BlockSpec((1, 2 * emb_dim), lambda i: (0, 0)),         # resident
                pl.BlockSpec((3, emb_dim), lambda i: (0, 0)),             # resident
            ],
            out_specs=(
                pl.BlockSpec((tb, emb_dim), lambda i: (i, 0)),
                pl.BlockSpec((tb, 3), lambda i: (i, 0)),
            ),
        ),
        compiler_params=pltpu.CompilerParams(
            dimension_semantics=("parallel",),   # no cross-tile state -> megacore OK
            vmem_limit_bytes=_vmem_budget_bytes(tb, emb_dim, w_bytes),
        ),
        cost_estimate=cost,
    )(emb_p, w, b, w_bccm)

    # tiny 3x3 moment finalize (exact, centered torch semantics) in plain JAX
    corr = _bccm_correlation(proj[:batch])
    return id_norm[:batch], corr


# ----------------------------------------------------------------------------
# Pure-JAX references (torch semantics) for correctness checks
# ----------------------------------------------------------------------------
def frfm_ref(emb, wa_t, ba, wg_t, bg, *, bf16=False):
    dt = jnp.bfloat16 if bf16 else jnp.float32
    age = jnp.maximum(jnp.dot(emb.astype(dt), wa_t.astype(dt),
                              preferred_element_type=jnp.float32) + ba, 0.0)
    gen = jnp.maximum(jnp.dot(emb.astype(dt), wg_t.astype(dt),
                              preferred_element_type=jnp.float32) + bg, 0.0)
    return emb - age - gen, age, gen


def normalize_ref(x):
    nrm = jnp.sqrt(jnp.sum(x * x, axis=1, keepdims=True))
    return x / jnp.maximum(nrm, 1e-12)


def bccm_ref(idf, agef, genf, w_id, w_age, w_gen):
    p_id = jnp.sum(idf * w_id, axis=1)
    p_ag = jnp.sum(agef * w_age, axis=1)
    p_gn = jnp.sum(genf * w_gen, axis=1)
    return _bccm_correlation(jnp.stack([p_id, p_ag, p_gn], axis=1))


if __name__ == "__main__":
    B, E = 8, 128  # small synthetic shapes (batch, embedding_size)

    key = jax.random.PRNGKey(0)
    k_emb, k_wa, k_ba, k_wg, k_bg, k_wid, k_wage, k_wgen = jax.random.split(key, 8)

    # "backbone" embeddings (InceptionResnetV1 itself not translated)
    embeddings = jax.random.normal(k_emb, (B, E), dtype=jnp.float32)

    scale = 1.0 / jnp.sqrt(jnp.float32(E))
    wa_t = jax.random.normal(k_wa, (E, E), dtype=jnp.float32) * scale   # [in, out]
    ba = jax.random.normal(k_ba, (1, E), dtype=jnp.float32) * scale
    wg_t = jax.random.normal(k_wg, (E, E), dtype=jnp.float32) * scale
    bg = jax.random.normal(k_bg, (1, E), dtype=jnp.float32) * scale

    # concatenated FRFM parameters -> one MXU-filling [E, 2E] matmul
    w_cat = jnp.concatenate([wa_t, wg_t], axis=1)
    b_cat = jnp.concatenate([ba, bg], axis=1)

    # BCCM Linear(E, 1, bias=False) weights, stored as [1, E] rows
    w_id = jax.random.normal(k_wid, (1, E), dtype=jnp.float32) * scale
    w_age = jax.random.normal(k_wage, (1, E), dtype=jnp.float32) * scale
    w_gen = jax.random.normal(k_wgen, (1, E), dtype=jnp.float32) * scale

    # --- forward hot path, f32 matmul: exact torch semantics ---
    out_f32 = jax.block_until_ready(
        multitask_dal_forward(embeddings, w_cat, b_cat, use_bf16_matmul=False))
    idf_f32, _, _ = frfm_ref(embeddings, wa_t, ba, wg_t, bg, bf16=False)
    ref_f32 = normalize_ref(idf_f32)
    assert jnp.allclose(out_f32, ref_f32, atol=1e-4, rtol=1e-4), "f32 FRFM mismatch"

    # --- forward hot path, bf16 MXU operands (default perf config) ---
    out_bf = jax.block_until_ready(
        multitask_dal_forward(embeddings, w_cat, b_cat, use_bf16_matmul=True))
    idf_bf, age_bf, gen_bf = frfm_ref(embeddings, wa_t, ba, wg_t, bg, bf16=True)
    ref_bf = normalize_ref(idf_bf)
    assert jnp.allclose(out_bf, ref_bf, atol=1e-3, rtol=1e-3), "bf16 FRFM mismatch"

    # --- awkward batch size exercises the cdiv + pad + slice path ---
    emb_odd = jax.random.normal(jax.random.PRNGKey(1), (10, E), dtype=jnp.float32)
    out_odd = jax.block_until_ready(
        multitask_dal_forward(emb_odd, w_cat, b_cat, use_bf16_matmul=False))
    idf_odd, _, _ = frfm_ref(emb_odd, wa_t, ba, wg_t, bg, bf16=False)
    assert out_odd.shape == (10, E)
    assert jnp.allclose(out_odd, normalize_ref(idf_odd), atol=1e-4, rtol=1e-4), \
        "padded-batch FRFM mismatch"

    # --- fused FRFM + BCCM (dependent modules, single launch) ---
    id_norm, corr = multitask_dal_frfm_bccm(embeddings, w_cat, b_cat,
                                            w_id, w_age, w_gen,
                                            use_bf16_matmul=True)
    id_norm = jax.block_until_ready(id_norm)
    corr = jax.block_until_ready(corr)

    corr_r = bccm_ref(idf_bf, age_bf, gen_bf, w_id, w_age, w_gen)
    assert jnp.allclose(id_norm, ref_bf, atol=1e-3, rtol=1e-3), "fused id mismatch"
    assert corr.shape == (1,), "BCCM output shape mismatch"
    assert jnp.allclose(corr, corr_r, rtol=1e-2, atol=1e-5), "BCCM corr mismatch"

    print("KERNEL_OK")
</pallas_src>

<mosaic_0001>
module attributes {stable_mosaic.version = 11 : i64} {
  func.func @frfm_normalize_kernel(%arg0: i32, %arg1: memref<8x128xf32, #tpu.memory_space<vmem>>, %arg2: memref<128x256xf32, #tpu.memory_space<vmem>>, %arg3: memref<1x256xf32, #tpu.memory_space<vmem>>, %arg4: memref<8x128xf32, #tpu.memory_space<vmem>>) attributes {dimension_semantics = [#tpu.dimension_semantics<parallel>], iteration_bounds = array<i64: 1>, scalar_prefetch = 0 : i64, scratch_operands = 0 : i64, tpu.core_type = #tpu.core_type<tc>, window_params = [{transform_indices = @transform_0, window_bounds = array<i64: 8, 128>}, {pipeline_mode = #tpu.pipeline_mode<synchronous>, transform_indices = @transform_1, window_bounds = array<i64: 128, 256>}, {pipeline_mode = #tpu.pipeline_mode<synchronous>, transform_indices = @transform_2, window_bounds = array<i64: 1, 256>}, {transform_indices = @transform_3, window_bounds = array<i64: 8, 128>}]} {
    %c0 = arith.constant 0 : index
    %c0_0 = arith.constant 0 : index
    %0 = vector.load %arg1[%c0, %c0_0] : memref<8x128xf32, #tpu.memory_space<vmem>>, vector<8x128xf32>
    %c0_1 = arith.constant 0 : index
    %c0_2 = arith.constant 0 : index
    %1 = vector.load %arg2[%c0_1, %c0_2] : memref<128x256xf32, #tpu.memory_space<vmem>>, vector<128x256xf32>
    %c0_3 = arith.constant 0 : index
    %c0_4 = arith.constant 0 : index
    %2 = vector.load %arg3[%c0_3, %c0_4] : memref<1x256xf32, #tpu.memory_space<vmem>>, vector<1x256xf32>
    %cst = arith.constant dense<0.000000e+00> : vector<8x256xf32>
    %3 = tpu.matmul %0, %1, %cst {dimension_numbers = #tpu.dot_dimension_numbers<[1], [0], [0], [1], [0, 0, 1, 1], [], []>} : vector<8x128xf32>, vector<128x256xf32>, vector<8x256xf32> -> vector<8x256xf32>
    %4 = vector.broadcast %2 : vector<1x256xf32> to vector<8x256xf32>
    %5 = arith.addf %3, %4 : vector<8x256xf32>
    %cst_5 = arith.constant 0.000000e+00 : f32
    %6 = vector.broadcast %cst_5 : f32 to vector<8x256xf32>
    %7 = arith.maximumf %5, %6 : vector<8x256xf32>
    %8 = vector.extract_strided_slice %7 {offsets = [0, 0], sizes = [8, 128], strides = [1, 1]} : vector<8x256xf32> to vector<8x128xf32>
    %9 = vector.extract_strided_slice %7 {offsets = [0, 128], sizes = [8, 128], strides = [1, 1]} : vector<8x256xf32> to vector<8x128xf32>
    %10 = arith.subf %0, %8 : vector<8x128xf32>
    %11 = arith.subf %10, %9 : vector<8x128xf32>
    %12 = arith.mulf %11, %11 : vector<8x128xf32>
    %cst_6 = arith.constant dense<0.000000e+00> : vector<8xf32>
    %13 = vector.multi_reduction <add>, %12, %cst_6 [1] : vector<8x128xf32> to vector<8xf32>
    %14 = vector.shape_cast %13 : vector<8xf32> to vector<8x1xf32>
    %cst_7 = arith.constant 1.000000e-24 : f32
    %15 = vector.broadcast %cst_7 : f32 to vector<8x1xf32>
    %16 = arith.maximumf %14, %15 : vector<8x1xf32>
    %17 = math.rsqrt %16 : vector<8x1xf32>
    %18 = vector.broadcast %17 : vector<8x1xf32> to vector<8x128xf32>
    %19 = arith.mulf %11, %18 : vector<8x128xf32>
    %c0_8 = arith.constant 0 : index
    %c0_9 = arith.constant 0 : index
    %20 = vector.load %arg4[%c0_8, %c0_9] : memref<8x128xf32, #tpu.memory_space<vmem>>, vector<8x128xf32>
    tpu.vector_store %arg4[%c0_8, %c0_9], %19 {strides = array<i32>} : memref<8x128xf32, #tpu.memory_space<vmem>>, vector<8x128xf32>,
    return
  }
  func.func @transform_0(%arg0: i32) -> (i32, i32) {
    %c0_i32 = arith.constant 0 : i32
    %c0_i32_0 = arith.constant 0 : i32
    return %arg0, %c0_i32 : i32, i32
  }
  func.func @transform_1(%arg0: i32) -> (i32, i32) {
    %c0_i32 = arith.constant 0 : i32
    %c0_i32_0 = arith.constant 0 : i32
    %c0_i32_1 = arith.constant 0 : i32
    return %c0_i32, %c0_i32_0 : i32, i32
  }
  func.func @transform_2(%arg0: i32) -> (i32, i32) {
    %c0_i32 = arith.constant 0 : i32
    %c0_i32_0 = arith.constant 0 : i32
    %c0_i32_1 = arith.constant 0 : i32
    return %c0_i32, %c0_i32_0 : i32, i32
  }
  func.func @transform_3(%arg0: i32) -> (i32, i32) {
    %c0_i32 = arith.constant 0 : i32
    %c0_i32_0 = arith.constant 0 : i32
    return %arg0, %c0_i32 : i32, i32
  }
}

</mosaic_0001>

<llo_original>
// kernel: tpu_custom_call.1
$region0: #{tpu_custom_call.1}
  #allocation0 [shape = 'u32[]', space=smem, size = 0x4, offset = 0x4, fixed_abs, tag = 'smem constant byte address 0x4 - core index']
  #allocation1 [shape = 'u32[144,128]{1,0:T(1,128)}', space=vmem, size = 0x12000, scoped, tag = 'internal scratch']
  %s0 = inlined_call_operand.hbm [shape: f32[8,128], index: 0, kind: input, shape index: {}]
  %s1 = inlined_call_operand.hbm [shape: f32[128,256], index: 1, kind: input, shape index: {}]
  %s2 = inlined_call_operand.vmem [shape: f32[1,256], index: 2, kind: input, shape index: {}]
  %s3 = inlined_call_operand.hbm [shape: f32[8,128], index: 3, kind: output, shape index: {}]
  %s4 = sld [smem:[#allocation0]]
  $region30: #{tpu_custom_call.1} parent=0
    _
  %s6 = ssub.s32 1, %s4
  %s7 = scalar_select 0, %s6, %s4
  $region1: #{tpu_custom_call.1} parent=0
    #allocation2 [shape = 'u8[4096]{0}', space=vmem, size = 0x1000, scoped, tag = 'input window, operand 0, single buffered']
    #allocation3 [shape = 's32[1]{0}', space=sflag, size = 0x4, scoped, tag = 'scoped memory for tpu_custom_call.1']
    #allocation4 [shape = 's32[1]{0}', space=sflag, size = 0x4, scoped, tag = 'scoped memory for tpu_custom_call.1']
    #allocation5 [shape = 'u8[131072]{0}', space=vmem, size = 0x20000, scoped, tag = 'input window, operand 1, single buffered']
    #allocation6 [shape = 's32[1]{0}', space=sflag, size = 0x4, scoped, tag = 'scoped memory for tpu_custom_call.1']
    #allocation7 [shape = 'u8[4096]{0}', space=vmem, size = 0x1000, scoped, tag = 'output window, operand 0, single buffered']
    %8 = vsyncpa [#allocation3], 0
    %9 = vsyncpa [#allocation6], 0
    %10 = vsyncpa [#allocation4], 0
    // Predicated region
    $region2: #{tpu_custom_call.1} parent=1 // pred_check
      _
    $region3: #{tpu_custom_call.1} parent=1 // pred_check_branch
      %12 = sbr.rel (0) target = $region5
    $region4: #{tpu_custom_call.1} parent=1 // pred_region
      %s14 = ssub.s32 128, 128
      %15 = vsyncadd [#allocation3], %s14
      %s17 = sshll.u32 [#allocation2], 4
      %s18 = int_to_ptr.vmem [resolvable:$true] %s17
      %20 = dma.hbm_to_vmem [thread:$0]  %s0, 128, %s18, [#allocation3]
    $region5: #{tpu_custom_call.1} parent=1 // pred_fallthru
      _
    // Predicated region
    $region6: #{tpu_custom_call.1} parent=1 // pred_check
      _
    $region7: #{tpu_custom_call.1} parent=1 // pred_check_branch
      %22 = sbr.rel (0) target = $region9
    $region8: #{tpu_custom_call.1} parent=1 // pred_region
      %s24 = ssub.s32 4096, 4096
      %25 = vsyncadd [#allocation6], %s24
      %s26 = sshll.u32 [#allocation5], 4
      %s27 = int_to_ptr.vmem [resolvable:$true] %s26
      %32 = dma.hbm_to_vmem [thread:$0]  %s1, 4096, %s27, [#allocation6], 256, 256, 16
    $region9: #{tpu_custom_call.1} parent=1 // pred_fallthru
      _
    // Predicated region
    $region10: #{tpu_custom_call.1} parent=1 // pred_check
      _
    $region11: #{tpu_custom_call.1} parent=1 // pred_check_branch
      %34 = sbr.rel (0) target = $region13
    $region12: #{tpu_custom_call.1} parent=1 // pred_region
      _
    $region13: #{tpu_custom_call.1} parent=1 // pred_fallthru
      _
    // Predicated region
    $region14: #{tpu_custom_call.1} parent=1 // pred_check
      _
    $region15: #{tpu_custom_call.1} parent=1 // pred_check_branch
      %36 = sbr.rel (0) target = $region17
    $region16: #{tpu_custom_call.1} parent=1 // pred_region
      %37 = dma.done [#allocation3], 128
    $region17: #{tpu_custom_call.1} parent=1 // pred_fallthru
      _
    // Predicated region
    $region18: #{tpu_custom_call.1} parent=1 // pred_check
      _
    $region19: #{tpu_custom_call.1} parent=1 // pred_check_branch
      %39 = sbr.rel (0) target = $region21
    $region20: #{tpu_custom_call.1} parent=1 // pred_region
      %40 = dma.done [#allocation6], 4096
    $region21: #{tpu_custom_call.1} parent=1 // pred_fallthru
      _
    %v41 = vld [vmem:[#allocation2] sm:$0xff]
    %v42 = vld [vmem:[#allocation5] sm:$0xff]
    %v43 = vld [vmem:[#allocation5 + $0x8] sm:$0xff]
    %v44 = vld [vmem:[#allocation5 + $0x10] sm:$0xff]
    %v45 = vld [vmem:[#allocation5 + $0x18] sm:$0xff]
    %v46 = vld [vmem:[#allocation5 + $0x20] sm:$0xff]
    %v47 = vld [vmem:[#allocation5 + $0x28] sm:$0xff]
    %v48 = vld [vmem:[#allocation5 + $0x30] sm:$0xff]
    %v49 = vld [vmem:[#allocation5 + $0x38] sm:$0xff]
    %v50 = vld [vmem:[#allocation5 + $0x40] sm:$0xff]
    %v51 = vld [vmem:[#allocation5 + $0x48] sm:$0xff]
    %v52 = vld [vmem:[#allocation5 + $0x50] sm:$0xff]
    %v53 = vld [vmem:[#allocation5 + $0x58] sm:$0xff]
    %v54 = vld [vmem:[#allocation5 + $0x60] sm:$0xff]
    %v55 = vld [vmem:[#allocation5 + $0x68] sm:$0xff]
    %v56 = vld [vmem:[#allocation5 + $0x70] sm:$0xff]
    %v57 = vld [vmem:[#allocation5 + $0x78] sm:$0xff]
    %v58 = vld [vmem:[#allocation5 + $0x80] sm:$0xff]
    %v59 = vld [vmem:[#allocation5 + $0x88] sm:$0xff]
    %v60 = vld [vmem:[#allocation5 + $0x90] sm:$0xff]
    %v61 = vld [vmem:[#allocation5 + $0x98] sm:$0xff]
    %v62 = vld [vmem:[#allocation5 + $0xa0] sm:$0xff]
    %v63 = vld [vmem:[#allocation5 + $0xa8] sm:$0xff]
    %v64 = vld [vmem:[#allocation5 + $0xb0] sm:$0xff]
    %v65 = vld [vmem:[#allocation5 + $0xb8] sm:$0xff]
    %v66 = vld [vmem:[#allocation5 + $0xc0] sm:$0xff]
    %v67 = vld [vmem:[#allocation5 + $0xc8] sm:$0xff]
    %v68 = vld [vmem:[#allocation5 + $0xd0] sm:$0xff]
    %v69 = vld [vmem:[#allocation5 + $0xd8] sm:$0xff]
    %v70 = vld [vmem:[#allocation5 + $0xe0] sm:$0xff]
    %v71 = vld [vmem:[#allocation5 + $0xe8] sm:$0xff]
    %v72 = vld [vmem:[#allocation5 + $0xf0] sm:$0xff]
    %v73 = vld [vmem:[#allocation5 + $0xf8] sm:$0xff]
    %v74 = vld [vmem:[%s2] sm:$0x3]
    %v76 = vlaneseq
    %v77 = vshrl.u32 %v76, 7
    %v78 = vsub.s32 0, %v77
    %v79 = vrot.slane %v74, %v78
    %v80 = vlaneseq
    %v81 = vshrl.u32 %v80, 7
    %v82 = vsub.s32 1, %v81
    %v83 = vrot.slane %v74, %v82
    %86 = vmatprep.subr.mxu0 %v73
    %87 = vmatpush1.msra.mxu0 %v72
    %88 = vmatprep.subr.mxu0 %v71
    %89 = vmatpush1.msra.mxu0 %v70
    %90 = vmatprep.subr.mxu0 %v69
    %91 = vmatpush1.msra.mxu0 %v68
    %92 = vmatprep.subr.mxu0 %v67
    %93 = vmatpush1.msra.mxu0 %v66
    %94 = vmatprep.subr.mxu0 %v65
    %95 = vmatpush1.msra.mxu0 %v64
    %96 = vmatprep.subr.mxu0 %v63
    %97 = vmatpush1.msra.mxu0 %v62
    %98 = vmatprep.subr.mxu0 %v61
    %99 = vmatpush1.msra.mxu0 %v60
    %100 = vmatprep.subr.mxu0 %v59
    %101 = vmatpush1.msra.mxu0 %v58
    %102 = vmatprep.subr.mxu0 %v57
    %103 = vmatpush1.msra.mxu0 %v56
    %104 = vmatprep.subr.mxu0 %v55
    %105 = vmatpush1.msra.mxu0 %v54
    %106 = vmatprep.subr.mxu0 %v53
    %107 = vmatpush1.msra.mxu0 %v52
    %108 = vmatprep.subr.mxu0 %v51
    %109 = vmatpush1.msra.mxu0 %v50
    %110 = vmatprep.subr.mxu0 %v49
    %111 = vmatpush1.msra.mxu0 %v48
    %112 = vmatprep.subr.mxu0 %v47
    %113 = vmatpush1.msra.mxu0 %v46
    %114 = vmatprep.subr.mxu0 %v45
    %115 = vmatpush1.msra.mxu0 %v44
    %116 = vmatprep.subr.mxu0 %v43
    %117 = vmatpush1.msra.mxu0 %v42
    %118 = vmatprep.subr.mxu0 0.0
    %119 = vmatpush2.msra.mxu0 0.0
    %120 = vmatprep.subr.mxu0 0.0
    %121 = vmatpush2.msra.mxu0 0.0
    %122 = vmatprep.subr.mxu0 0.0
    %123 = vmatpush2.msra.mxu0 0.0
    %124 = vmatprep.subr.mxu0 0.0
    %125 = vmatpush2.msra.mxu0 0.0
    %126 = vmatprep.subr.mxu0 0.0
    %127 = vmatpush2.msra.mxu0 0.0
    %128 = vmatprep.subr.mxu0 0.0
    %129 = vmatpush2.msra.mxu0 0.0
    %130 = vmatprep.subr.mxu0 0.0
    %131 = vmatpush2.msra.mxu0 0.0
    %132 = vmatprep.subr.mxu0 0.0
    %133 = vmatpush2.msra.mxu0 0.0
    %134 = vmatprep.subr.mxu0 0.0
    %135 = vmatpush2.msra.mxu0 0.0
    %136 = vmatprep.subr.mxu0 0.0
    %137 = vmatpush2.msra.mxu0 0.0
    %138 = vmatprep.subr.mxu0 0.0
    %139 = vmatpush2.msra.mxu0 0.0
    %140 = vmatprep.subr.mxu0 0.0
    %141 = vmatpush2.msra.mxu0 0.0
    %142 = vmatprep.subr.mxu0 0.0
    %143 = vmatpush2.msra.mxu0 0.0
    %144 = vmatprep.subr.mxu0 0.0
    %145 = vmatpush2.msra.mxu0 0.0
    %146 = vmatprep.subr.mxu0 0.0
    %147 = vmatpush2.msra.mxu0 0.0
    %148 = vmatprep.subr.mxu0 0.0
    %149 = vmatpush2.msra.mxu0 0.0
    %150 = vmatprep.mubr.f32.mxu0 0.0
    %151 = vmatmul.mubr.f32.gmra.mxu0 %v41
    %v152 = vpop.f32.mrf.mxu0
    %v153 = vadd.f32 %v79, %v152
    %v154 = vpop.f32.mrf.mxu0
    %v155 = vadd.f32 %v83, %v154
    %156 = vdwg.mxu0
    %v157 = vmax.f32 %v153, 0.0
    %v158 = vmax.f32 %v155, 0.0
    %v159 = vsub.f32 %v41, %v157
    %v160 = vsub.f32 %v159, %v158
    %v161 = vmul.f32 %v160, %v160
    %162 = vadd.xlane.f32.xlu0 %v161
    %v163 = vpop.xlane.xlu0 %162
    %v164 = vmax.f32 %v163, 1e-24
    %v165 = vrsqrt.pop %v164
    %v166 = vmul.f32 %v160, %v165
    %167 = vst [vmem:[#allocation7] sm:$0xff] %v166
    // Predicated region
    $region22: #{tpu_custom_call.1} parent=1 // pred_check
      _
    $region23: #{tpu_custom_call.1} parent=1 // pred_check_branch
      %169 = sbr.rel (0) target = $region25
    $region24: #{tpu_custom_call.1} parent=1 // pred_region
      %s171 = ssub.s32 128, 128
      %172 = vsyncadd [#allocation4], %s171
      %s174 = sshll.u32 [#allocation7], 4
      %s175 = int_to_ptr.vmem [resolvable:$true] %s174
      %177 = dma.vmem_to_hbm [thread:$0]  %s175, 128, %s3, [#allocation4]
    $region25: #{tpu_custom_call.1} parent=1 // pred_fallthru
      _
    // Predicated region
    $region26: #{tpu_custom_call.1} parent=1 // pred_check
      _
    $region27: #{tpu_custom_call.1} parent=1 // pred_check_branch
      %179 = sbr.rel (0) target = $region29
    $region28: #{tpu_custom_call.1} parent=1 // pred_region
      %180 = dma.done [#allocation4], 128
    $region29: #{tpu_custom_call.1} parent=1 // pred_fallthru
      _
    %181 = vsyncpa [#allocation3], 1
    %182 = vsyncpa [#allocation6], 1
    %183 = vsyncpa [#allocation4], 1

</llo_original>
